<compile_context>
chip_gen: v7x
topology: tpu7x:2x2x1
jax: 0.10.0
libtpu: 0.0.40
codegen_flags: <defaults>
</compile_context>

<pallas_src>
import jax
import jax.numpy as jnp
from jax import lax
from jax.experimental import pallas as pl
from jax.experimental.pallas import tpu as pltpu


def _round_up(x, m):
    return (x + m - 1) // m * m


# ---------------------------------------------------------------------------
# Kernel: embedding row gather via one-hot matmul on the MXU
#   out[r, :] = table[idx[r], :]
# ---------------------------------------------------------------------------
def _embed_kernel(idx_ref, table_ref, out_ref):
    idx = idx_ref[...]                                   # (TILE, 1) int32
    tile = idx.shape[0]
    L = table_ref.shape[0]
    # one-hot selector; entries are exactly 0.0 / 1.0 so the matmul reproduces
    # the f32 table rows exactly.
    onehot = (idx == lax.broadcasted_iota(jnp.int32, (tile, L), 1)).astype(
        table_ref.dtype)                                  # (TILE, L)
    out_ref[...] = jnp.dot(onehot, table_ref[...],
                           preferred_element_type=jnp.float32).astype(out_ref.dtype)


def width_embedding(widths, table, *, tile=512):
    """Pallas equivalent of nn.Embedding(L, width_dim)(widths)."""
    L, D = table.shape
    orig_shape = widths.shape
    flat = jnp.reshape(widths, (-1,)).astype(jnp.int32)
    n = flat.shape[0]

    # pad the row count to a sublane-friendly multiple of the tile size
    n8 = max(_round_up(n, 8), 8)
    tile = min(tile, n8)                                  # tile is a multiple of 8
    n_pad = _round_up(n8, tile)
    flat = jnp.pad(flat, (0, n_pad - n))                  # pad indices with 0 (valid row)
    idx2d = flat[:, None]                                 # (n_pad, 1)

    out = pl.pallas_call(
        _embed_kernel,
        out_shape=jax.ShapeDtypeStruct((n_pad, D), table.dtype),
        grid_spec=pltpu.PrefetchScalarGridSpec(
            num_scalar_prefetch=0,
            grid=(n_pad // tile,),
            in_specs=[
                pl.BlockSpec((tile, 1), lambda i: (i, 0)),   # indices, tiled over rows
                pl.BlockSpec((L, D), lambda i: (0, 0)),      # full table, VMEM-resident
            ],
            out_specs=pl.BlockSpec((tile, D), lambda i: (i, 0)),
        ),
        compiler_params=pltpu.CompilerParams(
            dimension_semantics=("parallel",),               # megacore-split the rows
        ),
    )(idx2d, table)

    return out[:n].reshape(*orig_shape, D)


# ---------------------------------------------------------------------------
if __name__ == "__main__":
    key = jax.random.PRNGKey(0)
    L, width_dim = 30, 20                                  # small, consistent with Width(L, 20)
    k_table, k_widths = jax.random.split(key)

    table = 0.1 * jax.random.normal(k_table, (L, width_dim), jnp.float32)
    widths = jax.random.randint(k_widths, (2, 16), 0, L, dtype=jnp.int32)

    out = width_embedding(widths, table)
    jax.block_until_ready(out)

    ref = table[widths]                                    # plain-JAX reference lookup
    assert out.shape == (2, 16, width_dim), out.shape
    assert jnp.allclose(out, ref, atol=1e-6), float(jnp.max(jnp.abs(out - ref)))
    print("KERNEL_OK")
</pallas_src>

<mosaic_0001>
module attributes {stable_mosaic.version = 11 : i64} {
  func.func @_embed_kernel(%arg0: i32, %arg1: memref<32x1xi32, #tpu.memory_space<vmem>>, %arg2: memref<30x20xf32, #tpu.memory_space<vmem>>, %arg3: memref<32x20xf32, #tpu.memory_space<vmem>>) attributes {dimension_semantics = [#tpu.dimension_semantics<parallel>], iteration_bounds = array<i64: 1>, scalar_prefetch = 0 : i64, scratch_operands = 0 : i64, tpu.core_type = #tpu.core_type<tc>, window_params = [{transform_indices = @transform_0, window_bounds = array<i64: 32, 1>}, {pipeline_mode = #tpu.pipeline_mode<synchronous>, transform_indices = @transform_1, window_bounds = array<i64: 30, 20>}, {transform_indices = @transform_2, window_bounds = array<i64: 32, 20>}]} {
    %c0 = arith.constant 0 : index
    %c0_0 = arith.constant 0 : index
    %0 = vector.load %arg1[%c0, %c0_0] : memref<32x1xi32, #tpu.memory_space<vmem>>, vector<32x1xi32>
    %1 = tpu.iota {dimensions = array<i32: 1>} : vector<32x30xi32>
    %2 = vector.broadcast %0 : vector<32x1xi32> to vector<32x30xi32>
    %3 = arith.cmpi eq, %2, %1 : vector<32x30xi32>
    %4 = arith.extui %3 : vector<32x30xi1> to vector<32x30xi32>
    %5 = arith.sitofp %4 : vector<32x30xi32> to vector<32x30xf32>
    %c0_1 = arith.constant 0 : index
    %c0_2 = arith.constant 0 : index
    %6 = vector.load %arg2[%c0_1, %c0_2] : memref<30x20xf32, #tpu.memory_space<vmem>>, vector<30x20xf32>
    %cst = arith.constant dense<0.000000e+00> : vector<32x20xf32>
    %7 = tpu.matmul %5, %6, %cst {dimension_numbers = #tpu.dot_dimension_numbers<[1], [0], [0], [1], [0, 0, 1, 1], [], []>} : vector<32x30xf32>, vector<30x20xf32>, vector<32x20xf32> -> vector<32x20xf32>
    %c0_3 = arith.constant 0 : index
    %c0_4 = arith.constant 0 : index
    %8 = vector.load %arg3[%c0_3, %c0_4] : memref<32x20xf32, #tpu.memory_space<vmem>>, vector<32x20xf32>
    tpu.vector_store %arg3[%c0_3, %c0_4], %7 {strides = array<i32>} : memref<32x20xf32, #tpu.memory_space<vmem>>, vector<32x20xf32>,
    return
  }
  func.func @transform_0(%arg0: i32) -> (i32, i32) {
    %c0_i32 = arith.constant 0 : i32
    %c0_i32_0 = arith.constant 0 : i32
    return %arg0, %c0_i32 : i32, i32
  }
  func.func @transform_1(%arg0: i32) -> (i32, i32) {
    %c0_i32 = arith.constant 0 : i32
    %c0_i32_0 = arith.constant 0 : i32
    %c0_i32_1 = arith.constant 0 : i32
    return %c0_i32, %c0_i32_0 : i32, i32
  }
  func.func @transform_2(%arg0: i32) -> (i32, i32) {
    %c0_i32 = arith.constant 0 : i32
    %c0_i32_0 = arith.constant 0 : i32
    return %arg0, %c0_i32 : i32, i32
  }
}

</mosaic_0001>

<llo_original>
// kernel: tpu_custom_call.1
$region0: #{tpu_custom_call.1}
  #allocation0 [shape = 'u32[]', space=smem, size = 0x4, offset = 0x4, fixed_abs, tag = 'smem constant byte address 0x4 - core index']
  #allocation1 [shape = 'u32[144,128]{1,0:T(1,128)}', space=vmem, size = 0x12000, scoped, tag = 'internal scratch']
  %s0 = inlined_call_operand.vmem [shape: s32[32,1], index: 0, kind: input, shape index: {}]
  %s1 = inlined_call_operand.vmem [shape: f32[30,20], index: 1, kind: input, shape index: {}]
  %s2 = inlined_call_operand.vmem [shape: f32[32,20], index: 2, kind: output, shape index: {}]
  %s3 = sld [smem:[#allocation0]]
  $region18: #{tpu_custom_call.1} parent=0
    _
  %s5 = ssub.s32 1, %s3
  %s6 = scalar_select 0, %s5, %s3
  // Predicated region
  $region2: #{tpu_custom_call.1} parent=0 // pred_check
    _
  $region3: #{tpu_custom_call.1} parent=0 // pred_check_branch
    %8 = sbr.rel (0) target = $region5
  $region4: #{tpu_custom_call.1} parent=0 // pred_region
    _
  $region5: #{tpu_custom_call.1} parent=0 // pred_fallthru
    _
  // Predicated region
  $region6: #{tpu_custom_call.1} parent=0 // pred_check
    _
  $region7: #{tpu_custom_call.1} parent=0 // pred_check_branch
    %10 = sbr.rel (0) target = $region9
  $region8: #{tpu_custom_call.1} parent=0 // pred_region
    _
  $region9: #{tpu_custom_call.1} parent=0 // pred_fallthru
    _
  %v11 = vld [vmem:[%s0] sm:$0xff]
  %v12 = vld [vmem:[%s0 + $0x8] sm:$0xff]
  %v13 = vld [vmem:[%s0 + $0x10] sm:$0xff]
  %v14 = vld [vmem:[%s0 + $0x18] sm:$0xff]
  %v15 = vlaneseq
  %v16 = vand.u32 %v15, 127
  %17 = vset.pattern.permute.xlu0 0
  %18 = vperm.xlu0 %17, %v11
  %v19 = vpop.permute.xlu0 %18
  %20 = vset.pattern.permute.xlu0 0
  %21 = vperm.xlu0 %20, %v12
  %v22 = vpop.permute.xlu0 %21
  %23 = vset.pattern.permute.xlu0 0
  %24 = vperm.xlu0 %23, %v13
  %v25 = vpop.permute.xlu0 %24
  %26 = vset.pattern.permute.xlu0 0
  %27 = vperm.xlu0 %26, %v14
  %v28 = vpop.permute.xlu0 %27
  %vm29 = vcmp.eq.s32.totalorder %v19, %v16
  %vm30 = vcmp.eq.s32.totalorder %v22, %v16
  %vm31 = vcmp.eq.s32.totalorder %v25, %v16
  %vm32 = vcmp.eq.s32.totalorder %v28, %v16
  %v33 = vsel %vm29, 1, 0
  %v34 = vsel %vm30, 1, 0
  %v35 = vsel %vm31, 1, 0
  %v36 = vsel %vm32, 1, 0
  %v37 = vcvt.s32.f32 %v33
  %v38 = vcvt.s32.f32 %v34
  %v39 = vcvt.s32.f32 %v35
  %v40 = vcvt.s32.f32 %v36
  %v41 = vld [vmem:[%s1] sm:$0xff]
  %v42 = vld [vmem:[%s1 + $0x8] sm:$0xff]
  %v43 = vld [vmem:[%s1 + $0x10] sm:$0xff]
  %v44 = vld [vmem:[%s1 + $0x18] sm:$0x3f]
  %vm45 = vcmask 244736
  %v47 = vsel %vm45, %v37, 0
  %v50 = vsel %vm45, %v38, 0
  %v53 = vsel %vm45, %v39, 0
  %v56 = vsel %vm45, %v40, 0
  %vm58 = vcmask 1045504
  %v60 = vsel %vm58, %v44, 0
  %62 = vmatprep.subr.mxu0 0.0
  %63 = vmatpush1.msra.mxu0 %v41
  %64 = vmatprep.subr.mxu0 0.0
  %65 = vmatpush1.msra.mxu0 %v42
  %66 = vmatprep.subr.mxu0 0.0
  %67 = vmatpush1.msra.mxu0 %v43
  %68 = vmatprep.subr.mxu0 0.0
  %69 = vmatpush1.msra.mxu0 %v60
  %70 = vmatprep.subr.mxu0 0.0
  %71 = vmatpush1.msra.mxu0 0.0
  %72 = vmatprep.subr.mxu0 0.0
  %73 = vmatpush1.msra.mxu0 0.0
  %74 = vmatprep.subr.mxu0 0.0
  %75 = vmatpush1.msra.mxu0 0.0
  %76 = vmatprep.subr.mxu0 0.0
  %77 = vmatpush1.msra.mxu0 0.0
  %78 = vmatprep.subr.mxu0 0.0
  %79 = vmatpush1.msra.mxu0 0.0
  %80 = vmatprep.subr.mxu0 0.0
  %81 = vmatpush1.msra.mxu0 0.0
  %82 = vmatprep.subr.mxu0 0.0
  %83 = vmatpush1.msra.mxu0 0.0
  %84 = vmatprep.subr.mxu0 0.0
  %85 = vmatpush1.msra.mxu0 0.0
  %86 = vmatprep.subr.mxu0 0.0
  %87 = vmatpush1.msra.mxu0 0.0
  %88 = vmatprep.subr.mxu0 0.0
  %89 = vmatpush1.msra.mxu0 0.0
  %90 = vmatprep.subr.mxu0 0.0
  %91 = vmatpush1.msra.mxu0 0.0
  %92 = vmatprep.subr.mxu0 0.0
  %93 = vmatpush1.msra.mxu0 0.0
  %94 = vmatprep.subr.mxu0 0.0
  %95 = vmatpush1.msra.mxu0 0.0
  %96 = vmatprep.subr.mxu0 0.0
  %97 = vmatpush1.msra.mxu0 0.0
  %98 = vmatprep.subr.mxu0 0.0
  %99 = vmatpush1.msra.mxu0 0.0
  %100 = vmatprep.subr.mxu0 0.0
  %101 = vmatpush1.msra.mxu0 0.0
  %102 = vmatprep.subr.mxu0 0.0
  %103 = vmatpush1.msra.mxu0 0.0
  %104 = vmatprep.subr.mxu0 0.0
  %105 = vmatpush1.msra.mxu0 0.0
  %106 = vmatprep.subr.mxu0 0.0
  %107 = vmatpush1.msra.mxu0 0.0
  %108 = vmatprep.subr.mxu0 0.0
  %109 = vmatpush1.msra.mxu0 0.0
  %110 = vmatprep.subr.mxu0 0.0
  %111 = vmatpush1.msra.mxu0 0.0
  %112 = vmatprep.subr.mxu0 0.0
  %113 = vmatpush1.msra.mxu0 0.0
  %114 = vmatprep.subr.mxu0 0.0
  %115 = vmatpush1.msra.mxu0 0.0
  %116 = vmatprep.subr.mxu0 0.0
  %117 = vmatpush1.msra.mxu0 0.0
  %118 = vmatprep.subr.mxu0 0.0
  %119 = vmatpush1.msra.mxu0 0.0
  %120 = vmatprep.subr.mxu0 0.0
  %121 = vmatpush1.msra.mxu0 0.0
  %122 = vmatprep.subr.mxu0 0.0
  %123 = vmatpush1.msra.mxu0 0.0
  %124 = vmatprep.subr.mxu0 0.0
  %125 = vmatpush1.msra.mxu0 0.0
  %126 = vmatprep.mubr.f32.mxu0 0.0
  %127 = vmatmul.mubr.f32.gmra.mrb[0].mxu0 %v47
  %v128 = vpop.f32.mrb[0].mxu0
  %v129 = vadd.f32 0.0, %v128
  %v130 = vpop.f32.mrb[0].mxu0
  %131 = vmatprep.mubr.f32.mxu0 0.0
  %132 = vmatmul.mubr.f32.gmra.mrb[0].mxu0 %v50
  %v133 = vpop.f32.mrb[0].mxu0
  %v134 = vadd.f32 0.0, %v133
  %v135 = vpop.f32.mrb[0].mxu0
  %136 = vmatprep.mubr.f32.mxu0 0.0
  %137 = vmatmul.mubr.f32.gmra.mrb[0].mxu0 %v53
  %v138 = vpop.f32.mrb[0].mxu0
  %v139 = vadd.f32 0.0, %v138
  %v140 = vpop.f32.mrb[0].mxu0
  %141 = vmatprep.mubr.f32.mxu0 0.0
  %142 = vmatmul.mubr.f32.gmra.mrb[0].mxu0 %v56
  %v143 = vpop.f32.mrb[0].mxu0
  %v144 = vadd.f32 0.0, %v143
  %v145 = vpop.f32.mrb[0].mxu0
  %146 = vdwg.mxu0
  %vm147 = vcmask 162816
  %148 = vst.msk [vmem:[%s2] sm:$0xff] %vm147, %v129
  %149 = vst.msk [vmem:[%s2 + $0x8] sm:$0xff] %vm147, %v134
  %150 = vst.msk [vmem:[%s2 + $0x10] sm:$0xff] %vm147, %v139
  %151 = vst.msk [vmem:[%s2 + $0x18] sm:$0xff] %vm147, %v144
  // Predicated region
  $region10: #{tpu_custom_call.1} parent=0 // pred_check
    _
  $region11: #{tpu_custom_call.1} parent=0 // pred_check_branch
    %153 = sbr.rel (0) target = $region13
  $region12: #{tpu_custom_call.1} parent=0 // pred_region
    _
  $region13: #{tpu_custom_call.1} parent=0 // pred_fallthru
    _
  // Predicated region
  $region14: #{tpu_custom_call.1} parent=0 // pred_check
    _
  $region15: #{tpu_custom_call.1} parent=0 // pred_check_branch
    %155 = sbr.rel (0) target = $region17
  $region16: #{tpu_custom_call.1} parent=0 // pred_region
    _
  $region17: #{tpu_custom_call.1} parent=0 // pred_fallthru
    _

</llo_original>
